<compile_context>
chip_gen: v7x
topology: tpu7x:2x2x1
jax: 0.10.0
libtpu: 0.0.40
codegen_flags: <defaults>
</compile_context>

<pallas_src>
import functools

import jax
import jax.numpy as jnp
from jax.experimental import pallas as pl
from jax.experimental.pallas import tpu as pltpu


def _round_up(x, m):
    return ((x + m - 1) // m) * m


def _glu_kernel(x_ref, w_ref, b_ref, o_ref, *, col_tile):
    """One (row_tile, col_tile) output tile of GLU.

    x_ref : (tm, in_dim)            activation row tile
    w_ref : (1, in_dim, 2*tn)       fused [W_lin_tile | W_gate_tile]
    b_ref : (1, 1, 2*tn)            fused [b_lin_tile | b_gate_tile] (f32)
    o_ref : (tm, tn)
    """
    x = x_ref[...]
    w = w_ref[0]                                            # (in_dim, 2*tn)
    # One MXU matmul for both linear and gate, f32 accumulation.
    y = jnp.dot(x, w, preferred_element_type=jnp.float32) + b_ref[0]
    lin = y[:, :col_tile]                                   # lane-aligned static slices
    gate = y[:, col_tile:]
    o_ref[...] = (lin * jax.nn.sigmoid(gate)).astype(o_ref.dtype)


@functools.partial(jax.jit, static_argnames=("row_tile", "col_tile", "compute_dtype"))
def gated_linear_unit(x, w_lin, b_lin, w_gate, b_gate, *,
                      row_tile=256, col_tile=None, compute_dtype=None):
    """x: (..., in_dim);  w_*: (in_dim, out_dim) (PyTorch weight.T);  b_*: (out_dim,)."""
    in_dim = x.shape[-1]
    out_dim = w_lin.shape[-1]
    lead_shape = x.shape[:-1]
    out_dtype = x.dtype

    mm_dtype = jnp.dtype(compute_dtype) if compute_dtype is not None else jnp.dtype(x.dtype)

    # ---- rows: flatten, pick tile, pad -------------------------------------
    x2d = x.reshape(-1, in_dim)
    n_rows = x2d.shape[0]
    tm = min(int(row_tile), _round_up(n_rows, 8))
    tm = _round_up(tm, 8)
    rows_pad = _round_up(n_rows, tm)
    if rows_pad != n_rows:
        x2d = jnp.pad(x2d, ((0, rows_pad - n_rows), (0, 0)))

    # ---- columns: pad out_dim to multiple of 128, pick N tile --------------
    out_pad = _round_up(out_dim, 128)
    if col_tile is None:
        tn = out_pad
        # keep the fused (in_dim, 2*tn) weight block (double-buffered) small
        # enough to be comfortable even on v7x's 64 MiB VMEM.
        while (in_dim * 2 * tn * mm_dtype.itemsize * 2 > 12 * (1 << 20)
               and tn % 256 == 0):
            tn //= 2
    else:
        tn = int(col_tile)
    assert tn % 128 == 0 and out_pad % tn == 0, "col_tile must be a 128-multiple dividing padded out_dim"
    n_col_tiles = out_pad // tn

    # ---- pack fused weights / biases per column tile -----------------------
    def pack_w(w):
        wp = jnp.pad(w, ((0, 0), (0, out_pad - out_dim))).astype(mm_dtype)
        return wp.reshape(in_dim, n_col_tiles, tn).transpose(1, 0, 2)   # (nt, in_dim, tn)

    def pack_b(b):
        bp = jnp.pad(b, (0, out_pad - out_dim)).astype(jnp.float32)
        return bp.reshape(n_col_tiles, 1, tn)                            # (nt, 1, tn)

    w_cat = jnp.concatenate([pack_w(w_lin), pack_w(w_gate)], axis=-1)    # (nt, in_dim, 2*tn)
    b_cat = jnp.concatenate([pack_b(b_lin), pack_b(b_gate)], axis=-1)    # (nt, 1, 2*tn)
    x2d = x2d.astype(mm_dtype)

    grid = (rows_pad // tm, n_col_tiles)

    # ---- VMEM budget: double-buffered tiles, clamped to be v7x-safe --------
    need = 2 * (tm * in_dim * mm_dtype.itemsize
                + in_dim * 2 * tn * mm_dtype.itemsize
                + 2 * tn * 4
                + tm * tn * jnp.dtype(out_dtype).itemsize)
    vmem_limit = int(min(64 * (1 << 20), max(32 * (1 << 20), 3 * need)))

    out2d = pl.pallas_call(
        functools.partial(_glu_kernel, col_tile=tn),
        out_shape=jax.ShapeDtypeStruct((rows_pad, out_pad), out_dtype),
        grid_spec=pltpu.PrefetchScalarGridSpec(
            num_scalar_prefetch=0,
            grid=grid,
            in_specs=[
                pl.BlockSpec((tm, in_dim), lambda i, j: (i, 0)),            # x row tile
                pl.BlockSpec((1, in_dim, 2 * tn), lambda i, j: (j, 0, 0)),  # fused weight tile
                pl.BlockSpec((1, 1, 2 * tn), lambda i, j: (j, 0, 0)),       # fused bias tile
            ],
            out_specs=pl.BlockSpec((tm, tn), lambda i, j: (i, j)),
        ),
        compiler_params=pltpu.CompilerParams(
            dimension_semantics=("parallel", "parallel"),
            vmem_limit_bytes=vmem_limit,
        ),
    )(x2d, w_cat, b_cat)

    out2d = out2d[:n_rows, :out_dim]
    return out2d.reshape(*lead_shape, out_dim)


def init_glu_params(key, in_dim, out_dim, dtype=jnp.float32):
    """Deterministic init mimicking nn.Linear's uniform(-1/sqrt(in), 1/sqrt(in))."""
    k1, k2, k3, k4 = jax.random.split(key, 4)
    bound = 1.0 / (in_dim ** 0.5)
    # stored as (in_dim, out_dim) == PyTorch weight.T
    w_lin = jax.random.uniform(k1, (in_dim, out_dim), dtype, -bound, bound)
    b_lin = jax.random.uniform(k2, (out_dim,), dtype, -bound, bound)
    w_gate = jax.random.uniform(k3, (in_dim, out_dim), dtype, -bound, bound)
    b_gate = jax.random.uniform(k4, (out_dim,), dtype, -bound, bound)
    return w_lin, b_lin, w_gate, b_gate


def _reference(x, w_lin, b_lin, w_gate, b_gate):
    lin = x @ w_lin + b_lin
    gate = x @ w_gate + b_gate
    return lin * jax.nn.sigmoid(gate)


if __name__ == "__main__":
    key = jax.random.PRNGKey(0)
    batch, seq, in_dim, out_dim = 2, 8, 32, 32

    kx, kp, kx2 = jax.random.split(key, 3)
    x = jax.random.normal(kx, (batch, seq, in_dim), jnp.float32)
    w_lin, b_lin, w_gate, b_gate = init_glu_params(kp, in_dim, out_dim)

    out = gated_linear_unit(x, w_lin, b_lin, w_gate, b_gate)
    out = jax.block_until_ready(out)
    ref = _reference(x, w_lin, b_lin, w_gate, b_gate)
    assert out.shape == (batch, seq, out_dim)
    assert jnp.allclose(out, ref, atol=1e-5, rtol=1e-5)

    # Non-tile-divisible row count exercises the row-padding path.
    x_odd = jax.random.normal(kx2, (3, 5, in_dim), jnp.float32)
    out_odd = jax.block_until_ready(
        gated_linear_unit(x_odd, w_lin, b_lin, w_gate, b_gate))
    ref_odd = _reference(x_odd, w_lin, b_lin, w_gate, b_gate)
    assert out_odd.shape == (3, 5, out_dim)
    assert jnp.allclose(out_odd, ref_odd, atol=1e-5, rtol=1e-5)

    print("KERNEL_OK")
</pallas_src>

<mosaic_0001>
module attributes {stable_mosaic.version = 11 : i64} {
  func.func @_glu_kernel(%arg0: i32, %arg1: i32, %arg2: memref<16x32xf32, #tpu.memory_space<vmem>>, %arg3: memref<1x32x256xf32, #tpu.memory_space<vmem>>, %arg4: memref<1x1x256xf32, #tpu.memory_space<vmem>>, %arg5: memref<16x128xf32, #tpu.memory_space<vmem>>) attributes {dimension_semantics = [#tpu.dimension_semantics<parallel>, #tpu.dimension_semantics<parallel>], iteration_bounds = array<i64: 1, 1>, scalar_prefetch = 0 : i64, scratch_operands = 0 : i64, tpu.core_type = #tpu.core_type<tc>, window_params = [{transform_indices = @transform_0, window_bounds = array<i64: 16, 32>}, {transform_indices = @transform_1, window_bounds = array<i64: 1, 32, 256>}, {transform_indices = @transform_2, window_bounds = array<i64: 1, 1, 256>}, {transform_indices = @transform_3, window_bounds = array<i64: 16, 128>}]} {
    %c0 = arith.constant 0 : index
    %c0_0 = arith.constant 0 : index
    %0 = vector.load %arg2[%c0, %c0_0] : memref<16x32xf32, #tpu.memory_space<vmem>>, vector<16x32xf32>
    %c0_1 = arith.constant 0 : index
    %c0_2 = arith.constant 0 : index
    %c0_3 = arith.constant 0 : index
    %1 = vector.load %arg3[%c0_1, %c0_2, %c0_3] : memref<1x32x256xf32, #tpu.memory_space<vmem>>, vector<1x32x256xf32>
    %2 = vector.shape_cast %1 : vector<1x32x256xf32> to vector<32x256xf32>
    %cst = arith.constant dense<0.000000e+00> : vector<16x256xf32>
    %3 = tpu.matmul %0, %2, %cst {dimension_numbers = #tpu.dot_dimension_numbers<[1], [0], [0], [1], [0, 0, 1, 1], [], []>} : vector<16x32xf32>, vector<32x256xf32>, vector<16x256xf32> -> vector<16x256xf32>
    %c0_4 = arith.constant 0 : index
    %c0_5 = arith.constant 0 : index
    %c0_6 = arith.constant 0 : index
    %4 = vector.load %arg4[%c0_4, %c0_5, %c0_6] : memref<1x1x256xf32, #tpu.memory_space<vmem>>, vector<1x1x256xf32>
    %5 = vector.shape_cast %4 : vector<1x1x256xf32> to vector<1x256xf32>
    %6 = vector.broadcast %5 : vector<1x256xf32> to vector<16x256xf32>
    %7 = arith.addf %3, %6 : vector<16x256xf32>
    %8 = vector.extract_strided_slice %7 {offsets = [0, 0], sizes = [16, 128], strides = [1, 1]} : vector<16x256xf32> to vector<16x128xf32>
    %9 = vector.extract_strided_slice %7 {offsets = [0, 128], sizes = [16, 128], strides = [1, 1]} : vector<16x256xf32> to vector<16x128xf32>
    %10 = arith.negf %9 : vector<16x128xf32>
    %11 = math.exp %10 : vector<16x128xf32>
    %cst_7 = arith.constant 1.000000e+00 : f32
    %12 = vector.broadcast %cst_7 : f32 to vector<16x128xf32>
    %13 = arith.addf %12, %11 : vector<16x128xf32>
    %14 = arith.divf %12, %13 : vector<16x128xf32>
    %15 = arith.mulf %8, %14 : vector<16x128xf32>
    %c0_8 = arith.constant 0 : index
    %c0_9 = arith.constant 0 : index
    %16 = vector.load %arg5[%c0_8, %c0_9] : memref<16x128xf32, #tpu.memory_space<vmem>>, vector<16x128xf32>
    tpu.vector_store %arg5[%c0_8, %c0_9], %15 {strides = array<i32>} : memref<16x128xf32, #tpu.memory_space<vmem>>, vector<16x128xf32>,
    return
  }
  func.func @transform_0(%arg0: i32, %arg1: i32) -> (i32, i32) {
    %c0_i32 = arith.constant 0 : i32
    %c0_i32_0 = arith.constant 0 : i32
    return %arg0, %c0_i32 : i32, i32
  }
  func.func @transform_1(%arg0: i32, %arg1: i32) -> (i32, i32, i32) {
    %c0_i32 = arith.constant 0 : i32
    %c0_i32_0 = arith.constant 0 : i32
    %c0_i32_1 = arith.constant 0 : i32
    return %arg1, %c0_i32, %c0_i32_0 : i32, i32, i32
  }
  func.func @transform_2(%arg0: i32, %arg1: i32) -> (i32, i32, i32) {
    %c0_i32 = arith.constant 0 : i32
    %c0_i32_0 = arith.constant 0 : i32
    %c0_i32_1 = arith.constant 0 : i32
    return %arg1, %c0_i32, %c0_i32_0 : i32, i32, i32
  }
  func.func @transform_3(%arg0: i32, %arg1: i32) -> (i32, i32) {
    %c0_i32 = arith.constant 0 : i32
    return %arg0, %arg1 : i32, i32
  }
}

</mosaic_0001>

<llo_original>
// kernel: gated_linear_unit.1
$region0: #{gated_linear_unit.1}
  #allocation0 [shape = 'u32[]', space=smem, size = 0x4, offset = 0x4, fixed_abs, tag = 'smem constant byte address 0x4 - core index']
  #allocation1 [shape = 'u32[144,128]{1,0:T(1,128)}', space=vmem, size = 0x12000, scoped, tag = 'internal scratch']
  %s0 = inlined_call_operand.vmem [shape: f32[16,32], index: 0, kind: input, shape index: {}]
  %s1 = inlined_call_operand.vmem [shape: f32[1,32,256], index: 1, kind: input, shape index: {}]
  %s2 = inlined_call_operand.vmem [shape: f32[1,1,256], index: 2, kind: input, shape index: {}]
  %s3 = inlined_call_operand.vmem [shape: f32[16,128], index: 3, kind: output, shape index: {}]
  %s4 = sld [smem:[#allocation0]]
  $region22: #{gated_linear_unit.1} parent=0
    _
  %s6 = ssub.s32 1, %s4
  %s7 = scalar_select 0, %s6, %s4
  // Predicated region
  $region2: #{gated_linear_unit.1} parent=0 // pred_check
    _
  $region3: #{gated_linear_unit.1} parent=0 // pred_check_branch
    %9 = sbr.rel (0) target = $region5
  $region4: #{gated_linear_unit.1} parent=0 // pred_region
    _
  $region5: #{gated_linear_unit.1} parent=0 // pred_fallthru
    _
  // Predicated region
  $region6: #{gated_linear_unit.1} parent=0 // pred_check
    _
  $region7: #{gated_linear_unit.1} parent=0 // pred_check_branch
    %11 = sbr.rel (0) target = $region9
  $region8: #{gated_linear_unit.1} parent=0 // pred_region
    _
  $region9: #{gated_linear_unit.1} parent=0 // pred_fallthru
    _
  // Predicated region
  $region10: #{gated_linear_unit.1} parent=0 // pred_check
    _
  $region11: #{gated_linear_unit.1} parent=0 // pred_check_branch
    %13 = sbr.rel (0) target = $region13
  $region12: #{gated_linear_unit.1} parent=0 // pred_region
    _
  $region13: #{gated_linear_unit.1} parent=0 // pred_fallthru
    _
  %v14 = vld [vmem:[%s0] sm:$0xff]
  %v15 = vld [vmem:[%s0 + $0x8] sm:$0xff]
  %v16 = vld [vmem:[%s1] sm:$0xff]
  %v17 = vld [vmem:[%s1 + $0x8] sm:$0xff]
  %v18 = vld [vmem:[%s1 + $0x10] sm:$0xff]
  %v19 = vld [vmem:[%s1 + $0x18] sm:$0xff]
  %v20 = vld [vmem:[%s1 + $0x20] sm:$0xff]
  %v21 = vld [vmem:[%s1 + $0x28] sm:$0xff]
  %v22 = vld [vmem:[%s1 + $0x30] sm:$0xff]
  %v23 = vld [vmem:[%s1 + $0x38] sm:$0xff]
  %v24 = vld [vmem:[%s2] sm:$0x3]
  %v26 = vlaneseq
  %v27 = vshrl.u32 %v26, 7
  %v28 = vsub.s32 0, %v27
  %v29 = vrot.slane %v24, %v28
  %v30 = vlaneseq
  %v31 = vshrl.u32 %v30, 7
  %v32 = vsub.s32 1, %v31
  %v33 = vrot.slane %v24, %v32
  %vm36 = vcmask 261120
  %v38 = vsel %vm36, %v14, 0
  %v41 = vsel %vm36, %v15, 0
  %43 = vmatprep.subr.mxu0 %v17
  %44 = vmatpush1.msra.mxu0 %v16
  %45 = vmatprep.subr.mxu0 %v19
  %46 = vmatpush1.msra.mxu0 %v18
  %47 = vmatprep.subr.mxu0 %v21
  %48 = vmatpush1.msra.mxu0 %v20
  %49 = vmatprep.subr.mxu0 %v23
  %50 = vmatpush1.msra.mxu0 %v22
  %51 = vmatprep.subr.mxu0 0.0
  %52 = vmatpush1.msra.mxu0 0.0
  %53 = vmatprep.subr.mxu0 0.0
  %54 = vmatpush1.msra.mxu0 0.0
  %55 = vmatprep.subr.mxu0 0.0
  %56 = vmatpush1.msra.mxu0 0.0
  %57 = vmatprep.subr.mxu0 0.0
  %58 = vmatpush1.msra.mxu0 0.0
  %59 = vmatprep.subr.mxu0 0.0
  %60 = vmatpush1.msra.mxu0 0.0
  %61 = vmatprep.subr.mxu0 0.0
  %62 = vmatpush1.msra.mxu0 0.0
  %63 = vmatprep.subr.mxu0 0.0
  %64 = vmatpush1.msra.mxu0 0.0
  %65 = vmatprep.subr.mxu0 0.0
  %66 = vmatpush1.msra.mxu0 0.0
  %67 = vmatprep.subr.mxu0 0.0
  %68 = vmatpush1.msra.mxu0 0.0
  %69 = vmatprep.subr.mxu0 0.0
  %70 = vmatpush1.msra.mxu0 0.0
  %71 = vmatprep.subr.mxu0 0.0
  %72 = vmatpush1.msra.mxu0 0.0
  %73 = vmatprep.subr.mxu0 0.0
  %74 = vmatpush1.msra.mxu0 0.0
  %75 = vmatprep.subr.mxu0 0.0
  %76 = vmatpush1.msra.mxu0 0.0
  %77 = vmatprep.subr.mxu0 0.0
  %78 = vmatpush1.msra.mxu0 0.0
  %79 = vmatprep.subr.mxu0 0.0
  %80 = vmatpush1.msra.mxu0 0.0
  %81 = vmatprep.subr.mxu0 0.0
  %82 = vmatpush1.msra.mxu0 0.0
  %83 = vmatprep.subr.mxu0 0.0
  %84 = vmatpush1.msra.mxu0 0.0
  %85 = vmatprep.subr.mxu0 0.0
  %86 = vmatpush1.msra.mxu0 0.0
  %87 = vmatprep.subr.mxu0 0.0
  %88 = vmatpush1.msra.mxu0 0.0
  %89 = vmatprep.subr.mxu0 0.0
  %90 = vmatpush1.msra.mxu0 0.0
  %91 = vmatprep.subr.mxu0 0.0
  %92 = vmatpush1.msra.mxu0 0.0
  %93 = vmatprep.subr.mxu0 0.0
  %94 = vmatpush1.msra.mxu0 0.0
  %95 = vmatprep.subr.mxu0 0.0
  %96 = vmatpush1.msra.mxu0 0.0
  %97 = vmatprep.subr.mxu0 0.0
  %98 = vmatpush1.msra.mxu0 0.0
  %99 = vmatprep.subr.mxu0 0.0
  %100 = vmatpush1.msra.mxu0 0.0
  %101 = vmatprep.subr.mxu0 0.0
  %102 = vmatpush1.msra.mxu0 0.0
  %103 = vmatprep.subr.mxu0 0.0
  %104 = vmatpush1.msra.mxu0 0.0
  %105 = vmatprep.subr.mxu0 0.0
  %106 = vmatpush1.msra.mxu0 0.0
  %107 = vmatprep.mubr.f32.mxu0 0.0
  %108 = vmatmul.mubr.f32.gmra.mrb[0].mxu0 %v38
  %v109 = vpop.f32.mrb[0].mxu0
  %v110 = vadd.f32 %v29, %v109
  %v111 = vpop.f32.mrb[0].mxu0
  %v112 = vadd.f32 %v33, %v111
  %113 = vmatprep.mubr.f32.mxu0 0.0
  %114 = vmatmul.mubr.f32.gmra.mrb[0].mxu0 %v41
  %v115 = vpop.f32.mrb[0].mxu0
  %v116 = vadd.f32 %v29, %v115
  %v117 = vpop.f32.mrb[0].mxu0
  %v118 = vadd.f32 %v33, %v117
  %119 = vdwg.mxu0
  %v120 = vxor.u32 %v112, 2147483648
  %v121 = vxor.u32 %v118, 2147483648
  %v122 = vmul.f32 %v120, 1.442695
  %v123 = vpow.pop %v122
  %v124 = vmul.f32 %v121, 1.442695
  %v125 = vpow.pop %v124
  %v126 = vadd.f32 %v123, 1.0
  %v127 = vadd.f32 %v125, 1.0
  %v128 = vrcp.pop %v126
  %v129 = vmul.f32 1.0, %v128
  %v130 = vrcp.pop %v127
  %v131 = vmul.f32 1.0, %v130
  %v132 = vmul.f32 %v110, %v129
  %v133 = vmul.f32 %v116, %v131
  %134 = vst [vmem:[%s3] sm:$0xff] %v132
  %135 = vst [vmem:[%s3 + $0x8] sm:$0xff] %v133
  // Predicated region
  $region14: #{gated_linear_unit.1} parent=0 // pred_check
    _
  $region15: #{gated_linear_unit.1} parent=0 // pred_check_branch
    %137 = sbr.rel (0) target = $region17
  $region16: #{gated_linear_unit.1} parent=0 // pred_region
    _
  $region17: #{gated_linear_unit.1} parent=0 // pred_fallthru
    _
  // Predicated region
  $region18: #{gated_linear_unit.1} parent=0 // pred_check
    _
  $region19: #{gated_linear_unit.1} parent=0 // pred_check_branch
    %139 = sbr.rel (0) target = $region21
  $region20: #{gated_linear_unit.1} parent=0 // pred_region
    _
  $region21: #{gated_linear_unit.1} parent=0 // pred_fallthru
    _

</llo_original>
